<compile_context>
chip_gen: v5e
topology: v5e:2x2
jax: 0.10.0
libtpu: 0.0.40
codegen_flags: <defaults>
</compile_context>

<pallas_src>
import jax
import jax.numpy as jnp
from jax.experimental import pallas as pl
from jax.experimental.pallas import tpu as pltpu


def _round_up(x, m):
    return (x + m - 1) // m * m


def _adaln_kernel(eps, inv_d):
    def kernel(x_ref, emb_ref, ws_ref, wb_ref, bs_ref, bb_ref, g_ref, b_ref, o_ref):
        # ---- LayerNorm(input) in f32: sums * (1/D), biased variance (torch semantics) ----
        x = x_ref[...].astype(jnp.float32)                         # (TM, D)
        mean = jnp.sum(x, axis=-1, keepdims=True) * inv_d
        centered = x - mean
        var = jnp.sum(centered * centered, axis=-1, keepdims=True) * inv_d
        ln = centered * jax.lax.rsqrt(var + eps)
        ln = ln * g_ref[...] + b_ref[...]                          # gamma/beta already f32

        # ---- project_layer(embedding): two (TM, D) matmuls, native dtype -> MXU, f32 acc ----
        emb = emb_ref[...]                                         # (TM, D), native dtype
        scale = jnp.dot(emb, ws_ref[...], preferred_element_type=jnp.float32) + bs_ref[...]
        shift = jnp.dot(emb, wb_ref[...], preferred_element_type=jnp.float32) + bb_ref[...]

        o_ref[...] = (scale * ln + shift).astype(o_ref.dtype)

    return kernel


def adaptive_layer_norm(x, embedding, w_proj, b_proj, gamma, beta, eps=1e-5, tm=256):
    """x, embedding: (..., d_model).  w_proj: (2*d_model, d_model) (torch Linear layout)."""
    orig_shape = x.shape
    d = orig_shape[-1]
    x2 = x.reshape(-1, d)
    e2 = embedding.reshape(-1, d)
    n = x2.shape[0]

    # Row tile: big enough to feed the MXU, never bigger than the (8-rounded) row count.
    tm = max(8, min(int(tm), _round_up(n, 8)))
    n_pad = _round_up(n, tm)
    if n_pad != n:
        x2 = jnp.pad(x2, ((0, n_pad - n), (0, 0)))
        e2 = jnp.pad(e2, ((0, n_pad - n), (0, 0)))

    # torch nn.Linear(d, 2d): weight (2d, d), bias (2d,);  proj = emb @ W^T + b.
    # Split into scale/shift halves so the kernel does two (D, D) matmuls and never
    # materializes / slices a (tm, 2D) intermediate.
    ws_t = w_proj[:d].T                                   # (D, D)  scale half, transposed
    wb_t = w_proj[d:].T                                   # (D, D)  shift half, transposed
    bs = b_proj[:d].astype(jnp.float32).reshape(1, d)
    bb = b_proj[d:].astype(jnp.float32).reshape(1, d)
    g2 = gamma.astype(jnp.float32).reshape(1, d)
    bt2 = beta.astype(jnp.float32).reshape(1, d)

    # Explicit VMEM budget: double-buffered x/emb/out row tiles + single-buffered weights.
    tile_bytes = tm * d * x2.dtype.itemsize
    weight_bytes = 2 * d * d * ws_t.dtype.itemsize
    vec_bytes = 4 * d * 4
    need = 3 * 2 * tile_bytes + weight_bytes + vec_bytes
    vmem_limit = int(min(max(2 * need + (8 << 20), 32 << 20), 96 << 20))

    def run(single_buffer_invariants):
        if single_buffer_invariants:
            def inv_spec(shape):
                return pl.BlockSpec(shape, lambda i: (0, 0),
                                    pipeline_mode=pl.Buffered(1))
        else:
            def inv_spec(shape):
                return pl.BlockSpec(shape, lambda i: (0, 0))

        grid_spec = pltpu.PrefetchScalarGridSpec(
            num_scalar_prefetch=0,
            grid=(n_pad // tm,),
            in_specs=[
                pl.BlockSpec((tm, d), lambda i: (i, 0)),   # x rows
                pl.BlockSpec((tm, d), lambda i: (i, 0)),   # embedding rows
                inv_spec((d, d)),                          # W_scale^T (resident)
                inv_spec((d, d)),                          # W_shift^T (resident)
                inv_spec((1, d)),                          # proj bias (scale half, f32)
                inv_spec((1, d)),                          # proj bias (shift half, f32)
                inv_spec((1, d)),                          # LayerNorm gamma (f32)
                inv_spec((1, d)),                          # LayerNorm beta  (f32)
            ],
            out_specs=pl.BlockSpec((tm, d), lambda i: (i, 0)),
        )

        return pl.pallas_call(
            _adaln_kernel(float(eps), 1.0 / float(d)),
            out_shape=jax.ShapeDtypeStruct((n_pad, d), x.dtype),
            grid_spec=grid_spec,
            compiler_params=pltpu.CompilerParams(
                dimension_semantics=("parallel",),
                vmem_limit_bytes=vmem_limit,
            ),
        )(x2, e2, ws_t, wb_t, bs, bb, g2, bt2)

    try:
        out = run(single_buffer_invariants=True)
    except Exception:
        # Safety net: if the single-buffering hint (pipeline_mode) is not available in
        # this JAX build, fall back to default double-buffered invariant inputs.
        out = run(single_buffer_invariants=False)

    return out[:n].reshape(orig_shape)


def _reference(x, embedding, w_proj, b_proj, gamma, beta, eps=1e-5):
    proj = embedding @ w_proj.T + b_proj
    d = x.shape[-1]
    w, b = proj[..., :d], proj[..., d:]
    mean = jnp.mean(x, axis=-1, keepdims=True)
    var = jnp.mean((x - mean) ** 2, axis=-1, keepdims=True)
    ln = (x - mean) / jnp.sqrt(var + eps) * gamma + beta
    return w * ln + b


if __name__ == "__main__":
    B, T, D = 2, 8, 32
    eps = 1e-5

    key = jax.random.PRNGKey(0)
    k_x, k_e, k_w, k_b = jax.random.split(key, 4)

    x = jax.random.normal(k_x, (B, T, D), dtype=jnp.float32)
    emb = jax.random.normal(k_e, (B, T, D), dtype=jnp.float32)

    # nn.Linear(d_model, 2*d_model): weight (2D, D), bias (2D,)
    bound = 1.0 / (D ** 0.5)
    w_proj = jax.random.uniform(k_w, (2 * D, D), minval=-bound, maxval=bound,
                                dtype=jnp.float32)
    b_proj = jax.random.uniform(k_b, (2 * D,), minval=-bound, maxval=bound,
                                dtype=jnp.float32)

    # nn.LayerNorm(d_model) default affine init: gamma=1, beta=0
    gamma = jnp.ones((D,), dtype=jnp.float32)
    beta = jnp.zeros((D,), dtype=jnp.float32)

    out = adaptive_layer_norm(x, emb, w_proj, b_proj, gamma, beta, eps=eps)
    out = jax.block_until_ready(out)

    ref = _reference(x, emb, w_proj, b_proj, gamma, beta, eps=eps)
    assert out.shape == (B, T, D)
    assert jnp.allclose(out, ref, atol=1e-4, rtol=1e-4), "mismatch vs reference"

    print("KERNEL_OK")
</pallas_src>

<mosaic_0001>
module attributes {stable_mosaic.version = 11 : i64} {
  func.func @kernel(%arg0: i32, %arg1: memref<16x32xf32, #tpu.memory_space<vmem>>, %arg2: memref<16x32xf32, #tpu.memory_space<vmem>>, %arg3: memref<32x32xf32, #tpu.memory_space<vmem>>, %arg4: memref<32x32xf32, #tpu.memory_space<vmem>>, %arg5: memref<1x32xf32, #tpu.memory_space<vmem>>, %arg6: memref<1x32xf32, #tpu.memory_space<vmem>>, %arg7: memref<1x32xf32, #tpu.memory_space<vmem>>, %arg8: memref<1x32xf32, #tpu.memory_space<vmem>>, %arg9: memref<16x32xf32, #tpu.memory_space<vmem>>) attributes {dimension_semantics = [#tpu.dimension_semantics<parallel>], iteration_bounds = array<i64: 1>, scalar_prefetch = 0 : i64, scratch_operands = 0 : i64, tpu.core_type = #tpu.core_type<tc>, window_params = [{transform_indices = @transform_0, window_bounds = array<i64: 16, 32>}, {transform_indices = @transform_1, window_bounds = array<i64: 16, 32>}, {pipeline_mode = #tpu.pipeline_mode<synchronous>, transform_indices = @transform_2, window_bounds = array<i64: 32, 32>}, {pipeline_mode = #tpu.pipeline_mode<synchronous>, transform_indices = @transform_3, window_bounds = array<i64: 32, 32>}, {pipeline_mode = #tpu.pipeline_mode<synchronous>, transform_indices = @transform_4, window_bounds = array<i64: 1, 32>}, {pipeline_mode = #tpu.pipeline_mode<synchronous>, transform_indices = @transform_5, window_bounds = array<i64: 1, 32>}, {pipeline_mode = #tpu.pipeline_mode<synchronous>, transform_indices = @transform_6, window_bounds = array<i64: 1, 32>}, {pipeline_mode = #tpu.pipeline_mode<synchronous>, transform_indices = @transform_7, window_bounds = array<i64: 1, 32>}, {transform_indices = @transform_8, window_bounds = array<i64: 16, 32>}]} {
    %c0 = arith.constant 0 : index
    %c0_0 = arith.constant 0 : index
    %0 = vector.load %arg1[%c0, %c0_0] : memref<16x32xf32, #tpu.memory_space<vmem>>, vector<16x32xf32>
    %cst = arith.constant dense<0.000000e+00> : vector<16xf32>
    %1 = vector.multi_reduction <add>, %0, %cst [1] : vector<16x32xf32> to vector<16xf32>
    %2 = vector.shape_cast %1 : vector<16xf32> to vector<16x1xf32>
    %cst_1 = arith.constant 3.125000e-02 : f32
    %3 = vector.broadcast %cst_1 : f32 to vector<16x1xf32>
    %4 = arith.mulf %2, %3 : vector<16x1xf32>
    %5 = vector.broadcast %4 : vector<16x1xf32> to vector<16x32xf32>
    %6 = arith.subf %0, %5 : vector<16x32xf32>
    %7 = arith.mulf %6, %6 : vector<16x32xf32>
    %cst_2 = arith.constant dense<0.000000e+00> : vector<16xf32>
    %8 = vector.multi_reduction <add>, %7, %cst_2 [1] : vector<16x32xf32> to vector<16xf32>
    %9 = vector.shape_cast %8 : vector<16xf32> to vector<16x1xf32>
    %cst_3 = arith.constant 3.125000e-02 : f32
    %10 = vector.broadcast %cst_3 : f32 to vector<16x1xf32>
    %11 = arith.mulf %9, %10 : vector<16x1xf32>
    %cst_4 = arith.constant 9.99999974E-6 : f32
    %12 = vector.broadcast %cst_4 : f32 to vector<16x1xf32>
    %13 = arith.addf %11, %12 : vector<16x1xf32>
    %14 = math.rsqrt %13 : vector<16x1xf32>
    %15 = vector.broadcast %14 : vector<16x1xf32> to vector<16x32xf32>
    %16 = arith.mulf %6, %15 : vector<16x32xf32>
    %c0_5 = arith.constant 0 : index
    %c0_6 = arith.constant 0 : index
    %17 = vector.load %arg7[%c0_5, %c0_6] : memref<1x32xf32, #tpu.memory_space<vmem>>, vector<1x32xf32>
    %18 = vector.broadcast %17 : vector<1x32xf32> to vector<16x32xf32>
    %19 = arith.mulf %16, %18 : vector<16x32xf32>
    %c0_7 = arith.constant 0 : index
    %c0_8 = arith.constant 0 : index
    %20 = vector.load %arg8[%c0_7, %c0_8] : memref<1x32xf32, #tpu.memory_space<vmem>>, vector<1x32xf32>
    %21 = vector.broadcast %20 : vector<1x32xf32> to vector<16x32xf32>
    %22 = arith.addf %19, %21 : vector<16x32xf32>
    %c0_9 = arith.constant 0 : index
    %c0_10 = arith.constant 0 : index
    %23 = vector.load %arg2[%c0_9, %c0_10] : memref<16x32xf32, #tpu.memory_space<vmem>>, vector<16x32xf32>
    %c0_11 = arith.constant 0 : index
    %c0_12 = arith.constant 0 : index
    %24 = vector.load %arg3[%c0_11, %c0_12] : memref<32x32xf32, #tpu.memory_space<vmem>>, vector<32x32xf32>
    %cst_13 = arith.constant dense<0.000000e+00> : vector<16x32xf32>
    %25 = tpu.matmul %23, %24, %cst_13 {dimension_numbers = #tpu.dot_dimension_numbers<[1], [0], [0], [1], [0, 0, 1, 1], [], []>} : vector<16x32xf32>, vector<32x32xf32>, vector<16x32xf32> -> vector<16x32xf32>
    %c0_14 = arith.constant 0 : index
    %c0_15 = arith.constant 0 : index
    %26 = vector.load %arg5[%c0_14, %c0_15] : memref<1x32xf32, #tpu.memory_space<vmem>>, vector<1x32xf32>
    %27 = vector.broadcast %26 : vector<1x32xf32> to vector<16x32xf32>
    %28 = arith.addf %25, %27 : vector<16x32xf32>
    %c0_16 = arith.constant 0 : index
    %c0_17 = arith.constant 0 : index
    %29 = vector.load %arg4[%c0_16, %c0_17] : memref<32x32xf32, #tpu.memory_space<vmem>>, vector<32x32xf32>
    %cst_18 = arith.constant dense<0.000000e+00> : vector<16x32xf32>
    %30 = tpu.matmul %23, %29, %cst_18 {dimension_numbers = #tpu.dot_dimension_numbers<[1], [0], [0], [1], [0, 0, 1, 1], [], []>} : vector<16x32xf32>, vector<32x32xf32>, vector<16x32xf32> -> vector<16x32xf32>
    %c0_19 = arith.constant 0 : index
    %c0_20 = arith.constant 0 : index
    %31 = vector.load %arg6[%c0_19, %c0_20] : memref<1x32xf32, #tpu.memory_space<vmem>>, vector<1x32xf32>
    %32 = vector.broadcast %31 : vector<1x32xf32> to vector<16x32xf32>
    %33 = arith.addf %30, %32 : vector<16x32xf32>
    %34 = arith.mulf %28, %22 : vector<16x32xf32>
    %35 = arith.addf %34, %33 : vector<16x32xf32>
    %c0_21 = arith.constant 0 : index
    %c0_22 = arith.constant 0 : index
    %36 = vector.load %arg9[%c0_21, %c0_22] : memref<16x32xf32, #tpu.memory_space<vmem>>, vector<16x32xf32>
    tpu.vector_store %arg9[%c0_21, %c0_22], %35 {strides = array<i32>} : memref<16x32xf32, #tpu.memory_space<vmem>>, vector<16x32xf32>,
    return
  }
  func.func @transform_0(%arg0: i32) -> (i32, i32) {
    %c0_i32 = arith.constant 0 : i32
    %c0_i32_0 = arith.constant 0 : i32
    return %arg0, %c0_i32 : i32, i32
  }
  func.func @transform_1(%arg0: i32) -> (i32, i32) {
    %c0_i32 = arith.constant 0 : i32
    %c0_i32_0 = arith.constant 0 : i32
    return %arg0, %c0_i32 : i32, i32
  }
  func.func @transform_2(%arg0: i32) -> (i32, i32) {
    %c0_i32 = arith.constant 0 : i32
    %c0_i32_0 = arith.constant 0 : i32
    %c0_i32_1 = arith.constant 0 : i32
    return %c0_i32, %c0_i32_0 : i32, i32
  }
  func.func @transform_3(%arg0: i32) -> (i32, i32) {
    %c0_i32 = arith.constant 0 : i32
    %c0_i32_0 = arith.constant 0 : i32
    %c0_i32_1 = arith.constant 0 : i32
    return %c0_i32, %c0_i32_0 : i32, i32
  }
  func.func @transform_4(%arg0: i32) -> (i32, i32) {
    %c0_i32 = arith.constant 0 : i32
    %c0_i32_0 = arith.constant 0 : i32
    %c0_i32_1 = arith.constant 0 : i32
    return %c0_i32, %c0_i32_0 : i32, i32
  }
  func.func @transform_5(%arg0: i32) -> (i32, i32) {
    %c0_i32 = arith.constant 0 : i32
    %c0_i32_0 = arith.constant 0 : i32
    %c0_i32_1 = arith.constant 0 : i32
    return %c0_i32, %c0_i32_0 : i32, i32
  }
  func.func @transform_6(%arg0: i32) -> (i32, i32) {
    %c0_i32 = arith.constant 0 : i32
    %c0_i32_0 = arith.constant 0 : i32
    %c0_i32_1 = arith.constant 0 : i32
    return %c0_i32, %c0_i32_0 : i32, i32
  }
  func.func @transform_7(%arg0: i32) -> (i32, i32) {
    %c0_i32 = arith.constant 0 : i32
    %c0_i32_0 = arith.constant 0 : i32
    %c0_i32_1 = arith.constant 0 : i32
    return %c0_i32, %c0_i32_0 : i32, i32
  }
  func.func @transform_8(%arg0: i32) -> (i32, i32) {
    %c0_i32 = arith.constant 0 : i32
    %c0_i32_0 = arith.constant 0 : i32
    return %arg0, %c0_i32 : i32, i32
  }
}

module attributes {stable_mosaic.version = 11 : i64} {
  func.func @kernel(%arg0: i32, %arg1: memref<16x32xf32, #tpu.memory_space<vmem>>, %arg2: memref<16x32xf32, #tpu.memory_space<vmem>>, %arg3: memref<32x32xf32, #tpu.memory_space<vmem>>, %arg4: memref<32x32xf32, #tpu.memory_space<vmem>>, %arg5: memref<1x32xf32, #tpu.memory_space<vmem>>, %arg6: memref<1x32xf32, #tpu.memory_space<vmem>>, %arg7: memref<1x32xf32, #tpu.memory_space<vmem>>, %arg8: memref<1x32xf32, #tpu.memory_space<vmem>>, %arg9: memref<16x32xf32, #tpu.memory_space<vmem>>) attributes {dimension_semantics = [#tpu.dimension_semantics<parallel>], iteration_bounds = array<i64: 1>, scalar_prefetch = 0 : i64, scratch_operands = 0 : i64, tpu.core_type = #tpu.core_type<tc>, window_params = [{transform_indices = @transform_0, window_bounds = array<i64: 16, 32>}, {transform_indices = @transform_1, window_bounds = array<i64: 16, 32>}, {pipeline_mode = #tpu.pipeline_mode<synchronous>, transform_indices = @transform_2, window_bounds = array<i64: 32, 32>}, {pipeline_mode = #tpu.pipeline_mode<synchronous>, transform_indices = @transform_3, window_bounds = array<i64: 32, 32>}, {pipeline_mode = #tpu.pipeline_mode<synchronous>, transform_indices = @transform_4, window_bounds = array<i64: 1, 32>}, {pipeline_mode = #tpu.pipeline_mode<synchronous>, transform_indices = @transform_5, window_bounds = array<i64: 1, 32>}, {pipeline_mode = #tpu.pipeline_mode<synchronous>, transform_indices = @transform_6, window_bounds = array<i64: 1, 32>}, {pipeline_mode = #tpu.pipeline_mode<synchronous>, transform_indices = @transform_7, window_bounds = array<i64: 1, 32>}, {transform_indices = @transform_8, window_bounds = array<i64: 16, 32>}]} {
    %c0 = arith.constant 0 : index
    %c0_0 = arith.constant 0 : index
    %0 = vector.load %arg1[%c0, %c0_0] : memref<16x32xf32, #tpu.memory_space<vmem>>, vector<16x32xf32>
    %cst = arith.constant dense<0.000000e+00> : vector<16xf32>
    %1 = vector.multi_reduction <add>, %0, %cst [1] : vector<16x32xf32> to vector<16xf32>
    %2 = vector.shape_cast %1 : vector<16xf32> to vector<16x1xf32>
    %cst_1 = arith.constant 3.125000e-02 : f32
    %3 = vector.broadcast %cst_1 : f32 to vector<16x1xf32>
    %4 = arith.mulf %2, %3 : vector<16x1xf32>
    %5 = vector.broadcast %4 : vector<16x1xf32> to vector<16x32xf32>
    %6 = arith.subf %0, %5 : vector<16x32xf32>
    %7 = arith.mulf %6, %6 : vector<16x32xf32>
    %cst_2 = arith.constant dense<0.000000e+00> : vector<16xf32>
    %8 = vector.multi_reduction <add>, %7, %cst_2 [1] : vector<16x32xf32> to vector<16xf32>
    %9 = vector.shape_cast %8 : vector<16xf32> to vector<16x1xf32>
    %cst_3 = arith.constant 3.125000e-02 : f32
    %10 = vector.broadcast %cst_3 : f32 to vector<16x1xf32>
    %11 = arith.mulf %9, %10 : vector<16x1xf32>
    %cst_4 = arith.constant 9.99999974E-6 : f32
    %12 = vector.broadcast %cst_4 : f32 to vector<16x1xf32>
    %13 = arith.addf %11, %12 : vector<16x1xf32>
    %14 = math.rsqrt %13 : vector<16x1xf32>
    %15 = vector.broadcast %14 : vector<16x1xf32> to vector<16x32xf32>
    %16 = arith.mulf %6, %15 : vector<16x32xf32>
    %c0_5 = arith.constant 0 : index
    %c0_6 = arith.constant 0 : index
    %17 = vector.load %arg7[%c0_5, %c0_6] : memref<1x32xf32, #tpu.memory_space<vmem>>, vector<1x32xf32>
    %18 = vector.broadcast %17 : vector<1x32xf32> to vector<16x32xf32>
    %19 = arith.mulf %16, %18 : vector<16x32xf32>
    %c0_7 = arith.constant 0 : index
    %c0_8 = arith.constant 0 : index
    %20 = vector.load %arg8[%c0_7, %c0_8] : memref<1x32xf32, #tpu.memory_space<vmem>>, vector<1x32xf32>
    %21 = vector.broadcast %20 : vector<1x32xf32> to vector<16x32xf32>
    %22 = arith.addf %19, %21 : vector<16x32xf32>
    %c0_9 = arith.constant 0 : index
    %c0_10 = arith.constant 0 : index
    %23 = vector.load %arg2[%c0_9, %c0_10] : memref<16x32xf32, #tpu.memory_space<vmem>>, vector<16x32xf32>
    %c0_11 = arith.constant 0 : index
    %c0_12 = arith.constant 0 : index
    %24 = vector.load %arg3[%c0_11, %c0_12] : memref<32x32xf32, #tpu.memory_space<vmem>>, vector<32x32xf32>
    %cst_13 = arith.constant dense<0.000000e+00> : vector<16x32xf32>
    %25 = tpu.matmul %23, %24, %cst_13 {dimension_numbers = #tpu.dot_dimension_numbers<[1], [0], [0], [1], [0, 0, 1, 1], [], []>} : vector<16x32xf32>, vector<32x32xf32>, vector<16x32xf32> -> vector<16x32xf32>
    %c0_14 = arith.constant 0 : index
    %c0_15 = arith.constant 0 : index
    %26 = vector.load %arg5[%c0_14, %c0_15] : memref<1x32xf32, #tpu.memory_space<vmem>>, vector<1x32xf32>
    %27 = vector.broadcast %26 : vector<1x32xf32> to vector<16x32xf32>
    %28 = arith.addf %25, %27 : vector<16x32xf32>
    %c0_16 = arith.constant 0 : index
    %c0_17 = arith.constant 0 : index
    %29 = vector.load %arg4[%c0_16, %c0_17] : memref<32x32xf32, #tpu.memory_space<vmem>>, vector<32x32xf32>
    %cst_18 = arith.constant dense<0.000000e+00> : vector<16x32xf32>
    %30 = tpu.matmul %23, %29, %cst_18 {dimension_numbers = #tpu.dot_dimension_numbers<[1], [0], [0], [1], [0, 0, 1, 1], [], []>} : vector<16x32xf32>, vector<32x32xf32>, vector<16x32xf32> -> vector<16x32xf32>
    %c0_19 = arith.constant 0 : index
    %c0_20 = arith.constant 0 : index
    %31 = vector.load %arg6[%c0_19, %c0_20] : memref<1x32xf32, #tpu.memory_space<vmem>>, vector<1x32xf32>
    %32 = vector.broadcast %31 : vector<1x32xf32> to vector<16x32xf32>
    %33 = arith.addf %30, %32 : vector<16x32xf32>
    %34 = arith.mulf %28, %22 : vector<16x32xf32>
    %35 = arith.addf %34, %33 : vector<16x32xf32>
    %c0_21 = arith.constant 0 : index
    %c0_22 = arith.constant 0 : index
    %36 = vector.load %arg9[%c0_21, %c0_22] : memref<16x32xf32, #tpu.memory_space<vmem>>, vector<16x32xf32>
    tpu.vector_store %arg9[%c0_21, %c0_22], %35 {strides = array<i32>} : memref<16x32xf32, #tpu.memory_space<vmem>>, vector<16x32xf32>,
    return
  }
  func.func @transform_0(%arg0: i32) -> (i32, i32) {
    %c0_i32 = arith.constant 0 : i32
    %c0_i32_0 = arith.constant 0 : i32
    return %arg0, %c0_i32 : i32, i32
  }
  func.func @transform_1(%arg0: i32) -> (i32, i32) {
    %c0_i32 = arith.constant 0 : i32
    %c0_i32_0 = arith.constant 0 : i32
    return %arg0, %c0_i32 : i32, i32
  }
  func.func @transform_2(%arg0: i32) -> (i32, i32) {
    %c0_i32 = arith.constant 0 : i32
    %c0_i32_0 = arith.constant 0 : i32
    %c0_i32_1 = arith.constant 0 : i32
    return %c0_i32, %c0_i32_0 : i32, i32
  }
  func.func @transform_3(%arg0: i32) -> (i32, i32) {
    %c0_i32 = arith.constant 0 : i32
    %c0_i32_0 = arith.constant 0 : i32
    %c0_i32_1 = arith.constant 0 : i32
    return %c0_i32, %c0_i32_0 : i32, i32
  }
  func.func @transform_4(%arg0: i32) -> (i32, i32) {
    %c0_i32 = arith.constant 0 : i32
    %c0_i32_0 = arith.constant 0 : i32
    %c0_i32_1 = arith.constant 0 : i32
    return %c0_i32, %c0_i32_0 : i32, i32
  }
  func.func @transform_5(%arg0: i32) -> (i32, i32) {
    %c0_i32 = arith.constant 0 : i32
    %c0_i32_0 = arith.constant 0 : i32
    %c0_i32_1 = arith.constant 0 : i32
    return %c0_i32, %c0_i32_0 : i32, i32
  }
  func.func @transform_6(%arg0: i32) -> (i32, i32) {
    %c0_i32 = arith.constant 0 : i32
    %c0_i32_0 = arith.constant 0 : i32
    %c0_i32_1 = arith.constant 0 : i32
    return %c0_i32, %c0_i32_0 : i32, i32
  }
  func.func @transform_7(%arg0: i32) -> (i32, i32) {
    %c0_i32 = arith.constant 0 : i32
    %c0_i32_0 = arith.constant 0 : i32
    %c0_i32_1 = arith.constant 0 : i32
    return %c0_i32, %c0_i32_0 : i32, i32
  }
  func.func @transform_8(%arg0: i32) -> (i32, i32) {
    %c0_i32 = arith.constant 0 : i32
    %c0_i32_0 = arith.constant 0 : i32
    return %arg0, %c0_i32 : i32, i32
  }
}

</mosaic_0001>

<llo_original>
// kernel: tpu_custom_call.1
$region0: #{tpu_custom_call.1}
  #allocation0 [shape = 'u32[]', space=smem, size = 0x4, offset = 0x4, fixed_abs, tag = 'smem constant byte address 0x4 - core index']
  #allocation1 [shape = 'u32[72,128]{1,0:T(1,128)}', space=vmem, size = 0x9000, scoped, tag = 'internal scratch']
  %s0 = inlined_call_operand.hbm [shape: f32[16,32], index: 0, kind: input, shape index: {}]
  %s1 = inlined_call_operand.hbm [shape: f32[16,32], index: 1, kind: input, shape index: {}]
  %s2 = inlined_call_operand.hbm [shape: f32[32,32], index: 2, kind: input, shape index: {}]
  %s3 = inlined_call_operand.hbm [shape: f32[32,32], index: 3, kind: input, shape index: {}]
  %s4 = inlined_call_operand.vmem [shape: f32[1,32], index: 4, kind: input, shape index: {}]
  %s5 = inlined_call_operand.vmem [shape: f32[1,32], index: 5, kind: input, shape index: {}]
  %s6 = inlined_call_operand.vmem [shape: f32[1,32], index: 6, kind: input, shape index: {}]
  %s7 = inlined_call_operand.vmem [shape: f32[1,32], index: 7, kind: input, shape index: {}]
  %s8 = inlined_call_operand.hbm [shape: f32[16,32], index: 8, kind: output, shape index: {}]
  %s9 = sld [smem:[#allocation0]]
  $region58: #{tpu_custom_call.1} parent=0
    _
  %s11 = ssub.s32 1, %s9
  %s12 = scalar_select 0, %s11, %s9
  $region1: #{tpu_custom_call.1} parent=0
    #allocation2 [shape = 'u8[8192]{0}', space=vmem, size = 0x2000, scoped, tag = 'input window, operand 0, single buffered']
    #allocation3 [shape = 's32[1]{0}', space=sflag, size = 0x4, scoped, tag = 'scoped memory for tpu_custom_call.1']
    #allocation4 [shape = 's32[1]{0}', space=sflag, size = 0x4, scoped, tag = 'scoped memory for tpu_custom_call.1']
    #allocation5 [shape = 'u8[8192]{0}', space=vmem, size = 0x2000, scoped, tag = 'input window, operand 1, single buffered']
    #allocation6 [shape = 's32[1]{0}', space=sflag, size = 0x4, scoped, tag = 'scoped memory for tpu_custom_call.1']
    #allocation7 [shape = 'u8[16384]{0}', space=vmem, size = 0x4000, scoped, tag = 'input window, operand 2, single buffered']
    #allocation8 [shape = 'u8[16384]{0}', space=vmem, size = 0x4000, scoped, tag = 'input window, operand 3, single buffered']
    #allocation9 [shape = 's32[1]{0}', space=sflag, size = 0x4, scoped, tag = 'scoped memory for tpu_custom_call.1']
    #allocation10 [shape = 'u8[8192]{0}', space=vmem, size = 0x2000, scoped, tag = 'output window, operand 0, single buffered']
    %13 = vsyncpa [#allocation3], 0
    %14 = vsyncpa [#allocation6], 0
    %15 = vsyncpa [#allocation9], 0
    %16 = vsyncpa [#allocation4], 0
    // Predicated region
    $region2: #{tpu_custom_call.1} parent=1 // pred_check
      _
    $region3: #{tpu_custom_call.1} parent=1 // pred_check_branch
      %18 = sbr.rel (0) target = $region5
    $region4: #{tpu_custom_call.1} parent=1 // pred_region
      %20 = vsyncadd [#allocation3], 0
      %s21 = sshll.u32 %s0, 4
      %s22 = int_to_ptr.hbm [resolvable:$true] %s21
      %s23 = sshll.u32 [#allocation2], 4
      %s24 = int_to_ptr.vmem [resolvable:$true] %s23
      %29 = dma.hbm_to_vmem [thread:$0]  %s22, 256, %s24, [#allocation3], 128, 128, 8
    $region5: #{tpu_custom_call.1} parent=1 // pred_fallthru
      _
    // Predicated region
    $region6: #{tpu_custom_call.1} parent=1 // pred_check
      _
    $region7: #{tpu_custom_call.1} parent=1 // pred_check_branch
      %31 = sbr.rel (0) target = $region9
    $region8: #{tpu_custom_call.1} parent=1 // pred_region
      %33 = vsyncadd [#allocation6], 0
      %s34 = sshll.u32 %s1, 4
      %s35 = int_to_ptr.hbm [resolvable:$true] %s34
      %s36 = sshll.u32 [#allocation5], 4
      %s37 = int_to_ptr.vmem [resolvable:$true] %s36
      %42 = dma.hbm_to_vmem [thread:$0]  %s35, 256, %s37, [#allocation6], 128, 128, 8
    $region9: #{tpu_custom_call.1} parent=1 // pred_fallthru
      _
    // Predicated region
    $region10: #{tpu_custom_call.1} parent=1 // pred_check
      _
    $region11: #{tpu_custom_call.1} parent=1 // pred_check_branch
      %44 = sbr.rel (0) target = $region13
    $region12: #{tpu_custom_call.1} parent=1 // pred_region
      %46 = vsyncadd [#allocation6], 0
      %s47 = sshll.u32 %s2, 4
      %s48 = int_to_ptr.hbm [resolvable:$true] %s47
      %s49 = sshll.u32 [#allocation7], 4
      %s50 = int_to_ptr.vmem [resolvable:$true] %s49
      %55 = dma.hbm_to_vmem [thread:$0]  %s48, 512, %s50, [#allocation6], 128, 128, 8
    $region13: #{tpu_custom_call.1} parent=1 // pred_fallthru
      _
    // Predicated region
    $region14: #{tpu_custom_call.1} parent=1 // pred_check
      _
    $region15: #{tpu_custom_call.1} parent=1 // pred_check_branch
      %57 = sbr.rel (0) target = $region17
    $region16: #{tpu_custom_call.1} parent=1 // pred_region
      %59 = vsyncadd [#allocation9], 0
      %s60 = sshll.u32 %s3, 4
      %s61 = int_to_ptr.hbm [resolvable:$true] %s60
      %s62 = sshll.u32 [#allocation8], 4
      %s63 = int_to_ptr.vmem [resolvable:$true] %s62
      %68 = dma.hbm_to_vmem [thread:$0]  %s61, 512, %s63, [#allocation9], 128, 128, 8
    $region17: #{tpu_custom_call.1} parent=1 // pred_fallthru
      _
    // Predicated region
    $region18: #{tpu_custom_call.1} parent=1 // pred_check
      _
    $region19: #{tpu_custom_call.1} parent=1 // pred_check_branch
      %70 = sbr.rel (0) target = $region21
    $region20: #{tpu_custom_call.1} parent=1 // pred_region
      _
    $region21: #{tpu_custom_call.1} parent=1 // pred_fallthru
      _
    // Predicated region
    $region22: #{tpu_custom_call.1} parent=1 // pred_check
      _
    $region23: #{tpu_custom_call.1} parent=1 // pred_check_branch
      %72 = sbr.rel (0) target = $region25
    $region24: #{tpu_custom_call.1} parent=1 // pred_region
      _
    $region25: #{tpu_custom_call.1} parent=1 // pred_fallthru
      _
    // Predicated region
    $region26: #{tpu_custom_call.1} parent=1 // pred_check
      _
    $region27: #{tpu_custom_call.1} parent=1 // pred_check_branch
      %74 = sbr.rel (0) target = $region29
    $region28: #{tpu_custom_call.1} parent=1 // pred_region
      _
    $region29: #{tpu_custom_call.1} parent=1 // pred_fallthru
      _
    // Predicated region
    $region30: #{tpu_custom_call.1} parent=1 // pred_check
      _
    $region31: #{tpu_custom_call.1} parent=1 // pred_check_branch
      %76 = sbr.rel (0) target = $region33
    $region32: #{tpu_custom_call.1} parent=1 // pred_region
      _
    $region33: #{tpu_custom_call.1} parent=1 // pred_fallthru
      _
    // Predicated region
    $region34: #{tpu_custom_call.1} parent=1 // pred_check
      _
    $region35: #{tpu_custom_call.1} parent=1 // pred_check_branch
      %78 = sbr.rel (0) target = $region37
    $region36: #{tpu_custom_call.1} parent=1 // pred_region
      %80 = dma.done [#allocation3], 256
    $region37: #{tpu_custom_call.1} parent=1 // pred_fallthru
      _
    // Predicated region
    $region38: #{tpu_custom_call.1} parent=1 // pred_check
      _
    $region39: #{tpu_custom_call.1} parent=1 // pred_check_branch
      %82 = sbr.rel (0) target = $region41
    $region40: #{tpu_custom_call.1} parent=1 // pred_region
      %84 = dma.done [#allocation6], 256
    $region41: #{tpu_custom_call.1} parent=1 // pred_fallthru
      _
    // Predicated region
    $region42: #{tpu_custom_call.1} parent=1 // pred_check
      _
    $region43: #{tpu_custom_call.1} parent=1 // pred_check_branch
      %86 = sbr.rel (0) target = $region45
    $region44: #{tpu_custom_call.1} parent=1 // pred_region
      %88 = dma.done [#allocation6], 512
    $region45: #{tpu_custom_call.1} parent=1 // pred_fallthru
      _
    // Predicated region
    $region46: #{tpu_custom_call.1} parent=1 // pred_check
      _
    $region47: #{tpu_custom_call.1} parent=1 // pred_check_branch
      %90 = sbr.rel (0) target = $region49
    $region48: #{tpu_custom_call.1} parent=1 // pred_region
      %92 = dma.done [#allocation9], 512
    $region49: #{tpu_custom_call.1} parent=1 // pred_fallthru
      _
    %v93 = vld [vmem:[#allocation2] sm:$0xff]
    %v94 = vld [vmem:[#allocation2 + $0x8] sm:$0xff]
    %vm95 = vcmask 261120
    %v96 = vsel %vm95, %v93, 0.0
    %97 = vadd.xlane.f32.xlu0 %v96
    %v98 = vpop.xlane.xlu0 %97
    %v99 = vsel %vm95, %v94, 0.0
    %100 = vadd.xlane.f32.xlu0 %v99
    %v101 = vpop.xlane.xlu0 %100
    %v102 = vmul.f32 %v98, 0.03125
    %v103 = vmul.f32 %v101, 0.03125
    %v104 = vsub.f32 %v93, %v102
    %v105 = vsub.f32 %v94, %v103
    %v106 = vmul.f32 %v104, %v104
    %v107 = vmul.f32 %v105, %v105
    %v108 = vsel %vm95, %v106, 0.0
    %109 = vadd.xlane.f32.xlu0 %v108
    %v110 = vpop.xlane.xlu0 %109
    %v111 = vsel %vm95, %v107, 0.0
    %112 = vadd.xlane.f32.xlu0 %v111
    %v113 = vpop.xlane.xlu0 %112
    %v114 = vmul.f32 %v110, 0.03125
    %v115 = vmul.f32 %v113, 0.03125
    %v116 = vadd.f32 %v114, 1e-05
    %v117 = vadd.f32 %v115, 1e-05
    %v118 = vrsqrt.pop %v116
    %v119 = vmul.f32 %v118, %v116
    %v120 = vmul.f32 %v119, %v118
    %v121 = vmul.f32 0.5, %v120
    %v122 = vsub.f32 1.5, %v121
    %v123 = vmul.f32 %v118, %v122
    %vm124 = vweird.f32 %v116
    %vm125 = vweird.f32 %v118
    %vm126 = vmor %vm124, %vm125
    %v127 = vsel %vm126, %v118, %v123
    %v128 = vrsqrt.pop %v117
    %v129 = vmul.f32 %v128, %v117
    %v130 = vmul.f32 %v129, %v128
    %v131 = vmul.f32 0.5, %v130
    %v132 = vsub.f32 1.5, %v131
    %v133 = vmul.f32 %v128, %v132
    %vm134 = vweird.f32 %v117
    %vm135 = vweird.f32 %v128
    %vm136 = vmor %vm134, %vm135
    %v137 = vsel %vm136, %v128, %v133
    %v138 = vmul.f32 %v104, %v127
    %v139 = vmul.f32 %v105, %v137
    %v140 = vld [vmem:[%s6] sm:$0x1]
    %v142 = vperm.slane %v140, 0
    %v144 = vmul.f32 %v138, %v142
    %v145 = vmul.f32 %v139, %v142
    %v146 = vld [vmem:[%s7] sm:$0x1]
    %v148 = vperm.slane %v146, 0
    %v150 = vadd.f32 %v144, %v148
    %v151 = vadd.f32 %v145, %v148
    %v152 = vld [vmem:[#allocation5] sm:$0xff]
    %v153 = vld [vmem:[#allocation5 + $0x8] sm:$0xff]
    %v154 = vld [vmem:[#allocation7] sm:$0xff]
    %v155 = vld [vmem:[#allocation7 + $0x8] sm:$0xff]
    %v156 = vld [vmem:[#allocation7 + $0x10] sm:$0xff]
    %v157 = vld [vmem:[#allocation7 + $0x18] sm:$0xff]
    %v158 = vld [vmem:[%s4] sm:$0x1]
    %v160 = vperm.slane %v158, 0
    %v163 = vsel %vm95, %v152, 0
    %v166 = vsel %vm95, %v153, 0
    %168 = vmatpush.msra.mxu0 0.0
    %169 = vmatpush.msra.mxu0 0.0
    %170 = vmatpush.msra.mxu0 0.0
    %171 = vmatpush.msra.mxu0 0.0
    %172 = vmatpush.msra.mxu0 0.0
    %173 = vmatpush.msra.mxu0 0.0
    %174 = vmatpush.msra.mxu0 0.0
    %175 = vmatpush.msra.mxu0 0.0
    %176 = vmatpush.msra.mxu0 0.0
    %177 = vmatpush.msra.mxu0 0.0
    %178 = vmatpush.msra.mxu0 0.0
    %179 = vmatpush.msra.mxu0 0.0
    %180 = vmatpush.msra.mxu0 %v157
    %181 = vmatpush.msra.mxu0 %v156
    %182 = vmatpush.msra.mxu0 %v155
    %183 = vmatpush.msra.mxu0 %v154
    %184 = vmatmul.f32.gmra.mxu0 %v163
    %v185 = vpop.f32.mrf.mxu0
    %v186 = vadd.f32 %v160, %v185
    %187 = vmatmul.f32.gmra.mxu0 %v166
    %v188 = vpop.f32.mrf.mxu0
    %v189 = vadd.f32 %v160, %v188
    %190 = vdwg.mxu0
    %v191 = vld [vmem:[#allocation8] sm:$0xff]
    %v192 = vld [vmem:[#allocation8 + $0x8] sm:$0xff]
    %v193 = vld [vmem:[#allocation8 + $0x10] sm:$0xff]
    %v194 = vld [vmem:[#allocation8 + $0x18] sm:$0xff]
    %v195 = vld [vmem:[%s5] sm:$0x1]
    %v197 = vperm.slane %v195, 0
    %199 = vmatpush.msra.mxu0 0.0
    %200 = vmatpush.msra.mxu0 0.0
    %201 = vmatpush.msra.mxu0 0.0
    %202 = vmatpush.msra.mxu0 0.0
    %203 = vmatpush.msra.mxu0 0.0
    %204 = vmatpush.msra.mxu0 0.0
    %205 = vmatpush.msra.mxu0 0.0
    %206 = vmatpush.msra.mxu0 0.0
    %207 = vmatpush.msra.mxu0 0.0
    %208 = vmatpush.msra.mxu0 0.0
    %209 = vmatpush.msra.mxu0 0.0
    %210 = vmatpush.msra.mxu0 0.0
    %211 = vmatpush.msra.mxu0 %v194
    %212 = vmatpush.msra.mxu0 %v193
    %213 = vmatpush.msra.mxu0 %v192
    %214 = vmatpush.msra.mxu0 %v191
    %215 = vmatmul.f32.gmra.mxu0 %v163
    %v216 = vpop.f32.mrf.mxu0
    %v217 = vadd.f32 %v197, %v216
    %218 = vmatmul.f32.gmra.mxu0 %v166
    %v219 = vpop.f32.mrf.mxu0
    %v220 = vadd.f32 %v197, %v219
    %221 = vdwg.mxu0
    %v222 = vmul.f32 %v186, %v150
    %v223 = vmul.f32 %v189, %v151
    %v224 = vadd.f32 %v222, %v217
    %v225 = vadd.f32 %v223, %v220
    %226 = vst.msk [vmem:[#allocation10] sm:$0xff] %vm95, %v224
    %227 = vst.msk [vmem:[#allocation10 + $0x8] sm:$0xff] %vm95, %v225
    // Predicated region
    $region50: #{tpu_custom_call.1} parent=1 // pred_check
      _
    $region51: #{tpu_custom_call.1} parent=1 // pred_check_branch
      %229 = sbr.rel (0) target = $region53
    $region52: #{tpu_custom_call.1} parent=1 // pred_region
      %231 = vsyncadd [#allocation4], 0
      %s232 = sshll.u32 [#allocation10], 4
      %s233 = int_to_ptr.vmem [resolvable:$true] %s232
      %s234 = sshll.u32 %s8, 4
      %s235 = int_to_ptr.hbm [resolvable:$true] %s234
      %240 = dma.vmem_to_hbm [thread:$0]  %s233, 256, %s235, [#allocation4], 128, 128, 8
    $region53: #{tpu_custom_call.1} parent=1 // pred_fallthru
      _
    // Predicated region
    $region54: #{tpu_custom_call.1} parent=1 // pred_check
      _
    $region55: #{tpu_custom_call.1} parent=1 // pred_check_branch
      %242 = sbr.rel (0) target = $region57
    $region56: #{tpu_custom_call.1} parent=1 // pred_region
      %244 = dma.done [#allocation4], 256
    $region57: #{tpu_custom_call.1} parent=1 // pred_fallthru
      _
    %245 = vsyncpa [#allocation3], 1
    %246 = vsyncpa [#allocation6], 1
    %247 = vsyncpa [#allocation9], 1
    %248 = vsyncpa [#allocation4], 1

// kernel: tpu_custom_call.1
$region0: #{tpu_custom_call.1}
  #allocation0 [shape = 'u32[]', space=smem, size = 0x4, offset = 0x4, fixed_abs, tag = 'smem constant byte address 0x4 - core index']
  #allocation1 [shape = 'u32[72,128]{1,0:T(1,128)}', space=vmem, size = 0x9000, scoped, tag = 'internal scratch']
  %s0 = inlined_call_operand.hbm [shape: f32[16,32], index: 0, kind: input, shape index: {}]
  %s1 = inlined_call_operand.hbm [shape: f32[16,32], index: 1, kind: input, shape index: {}]
  %s2 = inlined_call_operand.hbm [shape: f32[32,32], index: 2, kind: input, shape index: {}]
  %s3 = inlined_call_operand.hbm [shape: f32[32,32], index: 3, kind: input, shape index: {}]
  %s4 = inlined_call_operand.vmem [shape: f32[1,32], index: 4, kind: input, shape index: {}]
  %s5 = inlined_call_operand.vmem [shape: f32[1,32], index: 5, kind: input, shape index: {}]
  %s6 = inlined_call_operand.vmem [shape: f32[1,32], index: 6, kind: input, shape index: {}]
  %s7 = inlined_call_operand.vmem [shape: f32[1,32], index: 7, kind: input, shape index: {}]
  %s8 = inlined_call_operand.hbm [shape: f32[16,32], index: 8, kind: output, shape index: {}]
  %s9 = sld [smem:[#allocation0]]
  $region58: #{tpu_custom_call.1} parent=0
    _
  %s11 = ssub.s32 1, %s9
  %s12 = scalar_select 0, %s11, %s9
  $region1: #{tpu_custom_call.1} parent=0
    #allocation2 [shape = 'u8[8192]{0}', space=vmem, size = 0x2000, scoped, tag = 'input window, operand 0, single buffered']
    #allocation3 [shape = 's32[1]{0}', space=sflag, size = 0x4, scoped, tag = 'scoped memory for tpu_custom_call.1']
    #allocation4 [shape = 's32[1]{0}', space=sflag, size = 0x4, scoped, tag = 'scoped memory for tpu_custom_call.1']
    #allocation5 [shape = 'u8[8192]{0}', space=vmem, size = 0x2000, scoped, tag = 'input window, operand 1, single buffered']
    #allocation6 [shape = 's32[1]{0}', space=sflag, size = 0x4, scoped, tag = 'scoped memory for tpu_custom_call.1']
    #allocation7 [shape = 'u8[16384]{0}', space=vmem, size = 0x4000, scoped, tag = 'input window, operand 2, single buffered']
    #allocation8 [shape = 'u8[16384]{0}', space=vmem, size = 0x4000, scoped, tag = 'input window, operand 3, single buffered']
    #allocation9 [shape = 's32[1]{0}', space=sflag, size = 0x4, scoped, tag = 'scoped memory for tpu_custom_call.1']
    #allocation10 [shape = 'u8[8192]{0}', space=vmem, size = 0x2000, scoped, tag = 'output window, operand 0, single buffered']
    %13 = vsyncpa [#allocation3], 0
    %14 = vsyncpa [#allocation6], 0
    %15 = vsyncpa [#allocation9], 0
    %16 = vsyncpa [#allocation4], 0
    // Predicated region
    $region2: #{tpu_custom_call.1} parent=1 // pred_check
      _
    $region3: #{tpu_custom_call.1} parent=1 // pred_check_branch
      %18 = sbr.rel (0) target = $region5
    $region4: #{tpu_custom_call.1} parent=1 // pred_region
      %20 = vsyncadd [#allocation3], 0
      %s21 = sshll.u32 %s0, 4
      %s22 = int_to_ptr.hbm [resolvable:$true] %s21
      %s23 = sshll.u32 [#allocation2], 4
      %s24 = int_to_ptr.vmem [resolvable:$true] %s23
      %29 = dma.hbm_to_vmem [thread:$0]  %s22, 256, %s24, [#allocation3], 128, 128, 8
    $region5: #{tpu_custom_call.1} parent=1 // pred_fallthru
      _
    // Predicated region
    $region6: #{tpu_custom_call.1} parent=1 // pred_check
      _
    $region7: #{tpu_custom_call.1} parent=1 // pred_check_branch
      %31 = sbr.rel (0) target = $region9
    $region8: #{tpu_custom_call.1} parent=1 // pred_region
      %33 = vsyncadd [#allocation6], 0
      %s34 = sshll.u32 %s1, 4
      %s35 = int_to_ptr.hbm [resolvable:$true] %s34
      %s36 = sshll.u32 [#allocation5], 4
      %s37 = int_to_ptr.vmem [resolvable:$true] %s36
      %42 = dma.hbm_to_vmem [thread:$0]  %s35, 256, %s37, [#allocation6], 128, 128, 8
    $region9: #{tpu_custom_call.1} parent=1 // pred_fallthru
      _
    // Predicated region
    $region10: #{tpu_custom_call.1} parent=1 // pred_check
      _
    $region11: #{tpu_custom_call.1} parent=1 // pred_check_branch
      %44 = sbr.rel (0) target = $region13
    $region12: #{tpu_custom_call.1} parent=1 // pred_region
      %46 = vsyncadd [#allocation6], 0
      %s47 = sshll.u32 %s2, 4
      %s48 = int_to_ptr.hbm [resolvable:$true] %s47
      %s49 = sshll.u32 [#allocation7], 4
      %s50 = int_to_ptr.vmem [resolvable:$true] %s49
      %55 = dma.hbm_to_vmem [thread:$0]  %s48, 512, %s50, [#allocation6], 128, 128, 8
    $region13: #{tpu_custom_call.1} parent=1 // pred_fallthru
      _
    // Predicated region
    $region14: #{tpu_custom_call.1} parent=1 // pred_check
      _
    $region15: #{tpu_custom_call.1} parent=1 // pred_check_branch
      %57 = sbr.rel (0) target = $region17
    $region16: #{tpu_custom_call.1} parent=1 // pred_region
      %59 = vsyncadd [#allocation9], 0
      %s60 = sshll.u32 %s3, 4
      %s61 = int_to_ptr.hbm [resolvable:$true] %s60
      %s62 = sshll.u32 [#allocation8], 4
      %s63 = int_to_ptr.vmem [resolvable:$true] %s62
      %68 = dma.hbm_to_vmem [thread:$0]  %s61, 512, %s63, [#allocation9], 128, 128, 8
    $region17: #{tpu_custom_call.1} parent=1 // pred_fallthru
      _
    // Predicated region
    $region18: #{tpu_custom_call.1} parent=1 // pred_check
      _
    $region19: #{tpu_custom_call.1} parent=1 // pred_check_branch
      %70 = sbr.rel (0) target = $region21
    $region20: #{tpu_custom_call.1} parent=1 // pred_region
      _
    $region21: #{tpu_custom_call.1} parent=1 // pred_fallthru
      _
    // Predicated region
    $region22: #{tpu_custom_call.1} parent=1 // pred_check
      _
    $region23: #{tpu_custom_call.1} parent=1 // pred_check_branch
      %72 = sbr.rel (0) target = $region25
    $region24: #{tpu_custom_call.1} parent=1 // pred_region
      _
    $region25: #{tpu_custom_call.1} parent=1 // pred_fallthru
      _
    // Predicated region
    $region26: #{tpu_custom_call.1} parent=1 // pred_check
      _
    $region27: #{tpu_custom_call.1} parent=1 // pred_check_branch
      %74 = sbr.rel (0) target = $region29
    $region28: #{tpu_custom_call.1} parent=1 // pred_region
      _
    $region29: #{tpu_custom_call.1} parent=1 // pred_fallthru
      _
    // Predicated region
    $region30: #{tpu_custom_call.1} parent=1 // pred_check
      _
    $region31: #{tpu_custom_call.1} parent=1 // pred_check_branch
      %76 = sbr.rel (0) target = $region33
    $region32: #{tpu_custom_call.1} parent=1 // pred_region
      _
    $region33: #{tpu_custom_call.1} parent=1 // pred_fallthru
      _
    // Predicated region
    $region34: #{tpu_custom_call.1} parent=1 // pred_check
      _
    $region35: #{tpu_custom_call.1} parent=1 // pred_check_branch
      %78 = sbr.rel (0) target = $region37
    $region36: #{tpu_custom_call.1} parent=1 // pred_region
      %80 = dma.done [#allocation3], 256
    $region37: #{tpu_custom_call.1} parent=1 // pred_fallthru
      _
    // Predicated region
    $region38: #{tpu_custom_call.1} parent=1 // pred_check
      _
    $region39: #{tpu_custom_call.1} parent=1 // pred_check_branch
      %82 = sbr.rel (0) target = $region41
    $region40: #{tpu_custom_call.1} parent=1 // pred_region
      %84 = dma.done [#allocation6], 256
    $region41: #{tpu_custom_call.1} parent=1 // pred_fallthru
      _
    // Predicated region
    $region42: #{tpu_custom_call.1} parent=1 // pred_check
      _
    $region43: #{tpu_custom_call.1} parent=1 // pred_check_branch
      %86 = sbr.rel (0) target = $region45
    $region44: #{tpu_custom_call.1} parent=1 // pred_region
      %88 = dma.done [#allocation6], 512
    $region45: #{tpu_custom_call.1} parent=1 // pred_fallthru
      _
    // Predicated region
    $region46: #{tpu_custom_call.1} parent=1 // pred_check
      _
    $region47: #{tpu_custom_call.1} parent=1 // pred_check_branch
      %90 = sbr.rel (0) target = $region49
    $region48: #{tpu_custom_call.1} parent=1 // pred_region
      %92 = dma.done [#allocation9], 512
    $region49: #{tpu_custom_call.1} parent=1 // pred_fallthru
      _
    %v93 = vld [vmem:[#allocation2] sm:$0xff]
    %v94 = vld [vmem:[#allocation2 + $0x8] sm:$0xff]
    %vm95 = vcmask 261120
    %v96 = vsel %vm95, %v93, 0.0
    %97 = vadd.xlane.f32.xlu0 %v96
    %v98 = vpop.xlane.xlu0 %97
    %v99 = vsel %vm95, %v94, 0.0
    %100 = vadd.xlane.f32.xlu0 %v99
    %v101 = vpop.xlane.xlu0 %100
    %v102 = vmul.f32 %v98, 0.03125
    %v103 = vmul.f32 %v101, 0.03125
    %v104 = vsub.f32 %v93, %v102
    %v105 = vsub.f32 %v94, %v103
    %v106 = vmul.f32 %v104, %v104
    %v107 = vmul.f32 %v105, %v105
    %v108 = vsel %vm95, %v106, 0.0
    %109 = vadd.xlane.f32.xlu0 %v108
    %v110 = vpop.xlane.xlu0 %109
    %v111 = vsel %vm95, %v107, 0.0
    %112 = vadd.xlane.f32.xlu0 %v111
    %v113 = vpop.xlane.xlu0 %112
    %v114 = vmul.f32 %v110, 0.03125
    %v115 = vmul.f32 %v113, 0.03125
    %v116 = vadd.f32 %v114, 1e-05
    %v117 = vadd.f32 %v115, 1e-05
    %v118 = vrsqrt.pop %v116
    %v119 = vmul.f32 %v118, %v116
    %v120 = vmul.f32 %v119, %v118
    %v121 = vmul.f32 0.5, %v120
    %v122 = vsub.f32 1.5, %v121
    %v123 = vmul.f32 %v118, %v122
    %vm124 = vweird.f32 %v116
    %vm125 = vweird.f32 %v118
    %vm126 = vmor %vm124, %vm125
    %v127 = vsel %vm126, %v118, %v123
    %v128 = vrsqrt.pop %v117
    %v129 = vmul.f32 %v128, %v117
    %v130 = vmul.f32 %v129, %v128
    %v131 = vmul.f32 0.5, %v130
    %v132 = vsub.f32 1.5, %v131
    %v133 = vmul.f32 %v128, %v132
    %vm134 = vweird.f32 %v117
    %vm135 = vweird.f32 %v128
    %vm136 = vmor %vm134, %vm135
    %v137 = vsel %vm136, %v128, %v133
    %v138 = vmul.f32 %v104, %v127
    %v139 = vmul.f32 %v105, %v137
    %v140 = vld [vmem:[%s6] sm:$0x1]
    %v142 = vperm.slane %v140, 0
    %v144 = vmul.f32 %v138, %v142
    %v145 = vmul.f32 %v139, %v142
    %v146 = vld [vmem:[%s7] sm:$0x1]
    %v148 = vperm.slane %v146, 0
    %v150 = vadd.f32 %v144, %v148
    %v151 = vadd.f32 %v145, %v148
    %v152 = vld [vmem:[#allocation5] sm:$0xff]
    %v153 = vld [vmem:[#allocation5 + $0x8] sm:$0xff]
    %v154 = vld [vmem:[#allocation7] sm:$0xff]
    %v155 = vld [vmem:[#allocation7 + $0x8] sm:$0xff]
    %v156 = vld [vmem:[#allocation7 + $0x10] sm:$0xff]
    %v157 = vld [vmem:[#allocation7 + $0x18] sm:$0xff]
    %v158 = vld [vmem:[%s4] sm:$0x1]
    %v160 = vperm.slane %v158, 0
    %v163 = vsel %vm95, %v152, 0
    %v166 = vsel %vm95, %v153, 0
    %168 = vmatpush.msra.mxu0 0.0
    %169 = vmatpush.msra.mxu0 0.0
    %170 = vmatpush.msra.mxu0 0.0
    %171 = vmatpush.msra.mxu0 0.0
    %172 = vmatpush.msra.mxu0 0.0
    %173 = vmatpush.msra.mxu0 0.0
    %174 = vmatpush.msra.mxu0 0.0
    %175 = vmatpush.msra.mxu0 0.0
    %176 = vmatpush.msra.mxu0 0.0
    %177 = vmatpush.msra.mxu0 0.0
    %178 = vmatpush.msra.mxu0 0.0
    %179 = vmatpush.msra.mxu0 0.0
    %180 = vmatpush.msra.mxu0 %v157
    %181 = vmatpush.msra.mxu0 %v156
    %182 = vmatpush.msra.mxu0 %v155
    %183 = vmatpush.msra.mxu0 %v154
    %184 = vmatmul.f32.gmra.mxu0 %v163
    %v185 = vpop.f32.mrf.mxu0
    %v186 = vadd.f32 %v160, %v185
    %187 = vmatmul.f32.gmra.mxu0 %v166
    %v188 = vpop.f32.mrf.mxu0
    %v189 = vadd.f32 %v160, %v188
    %190 = vdwg.mxu0
    %v191 = vld [vmem:[#allocation8] sm:$0xff]
    %v192 = vld [vmem:[#allocation8 + $0x8] sm:$0xff]
    %v193 = vld [vmem:[#allocation8 + $0x10] sm:$0xff]
    %v194 = vld [vmem:[#allocation8 + $0x18] sm:$0xff]
    %v195 = vld [vmem:[%s5] sm:$0x1]
    %v197 = vperm.slane %v195, 0
    %199 = vmatpush.msra.mxu0 0.0
    %200 = vmatpush.msra.mxu0 0.0
    %201 = vmatpush.msra.mxu0 0.0
    %202 = vmatpush.msra.mxu0 0.0
    %203 = vmatpush.msra.mxu0 0.0
    %204 = vmatpush.msra.mxu0 0.0
    %205 = vmatpush.msra.mxu0 0.0
    %206 = vmatpush.msra.mxu0 0.0
    %207 = vmatpush.msra.mxu0 0.0
    %208 = vmatpush.msra.mxu0 0.0
    %209 = vmatpush.msra.mxu0 0.0
    %210 = vmatpush.msra.mxu0 0.0
    %211 = vmatpush.msra.mxu0 %v194
    %212 = vmatpush.msra.mxu0 %v193
    %213 = vmatpush.msra.mxu0 %v192
    %214 = vmatpush.msra.mxu0 %v191
    %215 = vmatmul.f32.gmra.mxu0 %v163
    %v216 = vpop.f32.mrf.mxu0
    %v217 = vadd.f32 %v197, %v216
    %218 = vmatmul.f32.gmra.mxu0 %v166
    %v219 = vpop.f32.mrf.mxu0
    %v220 = vadd.f32 %v197, %v219
    %221 = vdwg.mxu0
    %v222 = vmul.f32 %v186, %v150
    %v223 = vmul.f32 %v189, %v151
    %v224 = vadd.f32 %v222, %v217
    %v225 = vadd.f32 %v223, %v220
    %226 = vst.msk [vmem:[#allocation10] sm:$0xff] %vm95, %v224
    %227 = vst.msk [vmem:[#allocation10 + $0x8] sm:$0xff] %vm95, %v225
    // Predicated region
    $region50: #{tpu_custom_call.1} parent=1 // pred_check
      _
    $region51: #{tpu_custom_call.1} parent=1 // pred_check_branch
      %229 = sbr.rel (0) target = $region53
    $region52: #{tpu_custom_call.1} parent=1 // pred_region
      %231 = vsyncadd [#allocation4], 0
      %s232 = sshll.u32 [#allocation10], 4
      %s233 = int_to_ptr.vmem [resolvable:$true] %s232
      %s234 = sshll.u32 %s8, 4
      %s235 = int_to_ptr.hbm [resolvable:$true] %s234
      %240 = dma.vmem_to_hbm [thread:$0]  %s233, 256, %s235, [#allocation4], 128, 128, 8
    $region53: #{tpu_custom_call.1} parent=1 // pred_fallthru
      _
    // Predicated region
    $region54: #{tpu_custom_call.1} parent=1 // pred_check
      _
    $region55: #{tpu_custom_call.1} parent=1 // pred_check_branch
      %242 = sbr.rel (0) target = $region57
    $region56: #{tpu_custom_call.1} parent=1 // pred_region
      %244 = dma.done [#allocation4], 256
    $region57: #{tpu_custom_call.1} parent=1 // pred_fallthru
      _
    %245 = vsyncpa [#allocation3], 1
    %246 = vsyncpa [#allocation6], 1
    %247 = vsyncpa [#allocation9], 1
    %248 = vsyncpa [#allocation4], 1

</llo_original>
